<compile_context>
chip_gen: v7x
topology: tpu7x:2x2x1
jax: 0.10.0
libtpu: 0.0.40
codegen_flags: <defaults>
</compile_context>

<pallas_src>
import functools

import jax
import jax.numpy as jnp
from jax import lax
from jax.experimental import pallas as pl
from jax.experimental.pallas import tpu as pltpu


def _bert_embeddings_kernel(
    wid_ref,                       # [rows] int32 word ids (SMEM, scalar prefetch)
    wtab_ref,                      # [vocab, H] word-embedding table (HBM / ANY)
    pos_ref,                       # [tm, H] position-embedding rows for this tile (VMEM)
    tid_ref,                       # [tm, 1] int32 token-type ids (VMEM)
    ttab_ref,                      # [type_vocab, H] token-type table (VMEM, resident)
    gamma_ref, beta_ref,           # [1, H] LayerNorm params (VMEM, invariant)
    o_ref,                         # [tm, H] output tile (VMEM)
    wbuf, sem,                     # scratch: word gather buffer + DMA semaphore
    *, tm, eps, type_vocab):
  base = pl.multiple_of(pl.program_id(0) * tm, tm)

  # ---- issue: tm per-row word-embedding gathers, all in flight at once ----
  unroll = 8 if tm % 8 == 0 else 1

  def issue(blk, carry):
    start = pl.multiple_of(blk * unroll, unroll)
    for u in range(unroll):                       # static unroll: co-issue
      t = start + u
      row = wid_ref[base + t]                     # SMEM scalar read (before wait)
      pltpu.make_async_copy(wtab_ref.at[pl.ds(row, 1)],
                            wbuf.at[pl.ds(t, 1)],
                            sem.at[0]).start()
    return carry

  lax.fori_loop(0, tm // unroll, issue, 0)

  # ---- independent compute while the gathers are in flight ----
  # Token-type embedding: type_vocab is tiny (2 for BERT) and the whole table
  # is resident in VMEM, so build it with broadcast selects (VPU is idle).
  tid = tid_ref[...]                                        # (tm, 1) int32
  te = (tid == 0).astype(jnp.float32) * ttab_ref[pl.ds(0, 1), :].astype(jnp.float32)
  for v in range(1, type_vocab):
    te = te + (tid == v).astype(jnp.float32) * ttab_ref[pl.ds(v, 1), :].astype(jnp.float32)

  pe = pos_ref[...].astype(jnp.float32)
  gamma = gamma_ref[...].astype(jnp.float32)
  beta = beta_ref[...].astype(jnp.float32)

  # ---- one aggregated wait: the tm row copies above (each H*itemsize bytes,
  # same table / dtype) sum to exactly one (tm, H)-sized transfer ----
  pltpu.make_async_copy(wtab_ref.at[pl.ds(0, tm)], wbuf, sem.at[0]).wait()

  # embeddings = word + token_type + position, then LayerNorm (f32 math,
  # torch semantics with eps=1e-12); dropout = identity (eval mode).
  x = wbuf[...].astype(jnp.float32) + te + pe
  mean = jnp.mean(x, axis=-1, keepdims=True)
  cent = x - mean
  var = jnp.mean(cent * cent, axis=-1, keepdims=True)
  y = cent * lax.rsqrt(var + eps)
  o_ref[...] = (y * gamma + beta).astype(o_ref.dtype)


def _pick_tile(rows, S, requested):
  """Largest tile <= requested that divides rows, is a multiple of 8 (or the
  whole array) and is compatible with S (tm | S or S | tm)."""
  start = int(min(requested, rows))
  for cand in range(start, 0, -1):
    if rows % cand:
      continue
    if not (cand % S == 0 or S % cand == 0):
      continue
    if cand % 8 != 0 and cand != rows:
      continue
    return cand
  return rows  # full array is always a legal block shape


def bert_embeddings(input_ids, params, *, token_type_ids=None,
                    position_ids=None, past_key_values_length=0,
                    eps=1e-12, tm=512):
  """input_ids: [B, S] int; returns [B, S, H] embeddings."""
  B, S = input_ids.shape
  wtab = params["word_embeddings"]          # [vocab, H]
  ptab = params["position_embeddings"]      # [max_pos, H]
  ttab = params["token_type_embeddings"]    # [type_vocab, H]
  vocab, H = wtab.shape
  type_vocab = ttab.shape[0]
  rows = B * S

  if token_type_ids is None:
    token_type_ids = jnp.zeros((B, S), jnp.int32)

  # Position embeddings: the default "absolute" path is a contiguous slice of
  # the table (past_key_values_length + arange(S)).  User-supplied [S] / [1,S]
  # ids are a tiny S-row gather done once in the wrapper.
  if position_ids is None:
    pos_slab = lax.dynamic_slice_in_dim(ptab, past_key_values_length, S, axis=0)
  else:
    # TODO(synk): per-batch-varying position_ids ([B, S] with different rows
    # per batch entry) are not supported; this assumes the HF [1, S] layout.
    pos_ids = jnp.asarray(position_ids).reshape(-1)[:S].astype(jnp.int32)
    pos_slab = jnp.take(ptab, pos_ids, axis=0)

  tm = _pick_tile(rows, S, tm)
  assert vocab >= tm, "word-embedding table must have at least tm rows"

  if tm <= S:
    pos_in = pos_slab                      # [S, H]; block index i % (S // tm)
    pos_blocks = S // tm
  else:
    pos_in = jnp.tile(pos_slab, (tm // S, 1))   # tile spans whole sequences
    pos_blocks = 1

  wid = input_ids.reshape(rows).astype(jnp.int32)
  tid = jnp.broadcast_to(token_type_ids, (B, S)).reshape(rows, 1).astype(jnp.int32)
  gamma = params["ln_gamma"].reshape(1, H)
  beta = params["ln_beta"].reshape(1, H)

  grid = (rows // tm,)

  itemsize = jnp.dtype(wtab.dtype).itemsize
  cost = pl.CostEstimate(
      flops=10 * rows * H,                        # adds + LayerNorm
      transcendentals=rows,                       # one rsqrt per row
      bytes_accessed=2 * rows * H * itemsize + S * H * itemsize + 2 * rows * 4)

  out2d = pl.pallas_call(
      functools.partial(_bert_embeddings_kernel, tm=tm, eps=eps,
                        type_vocab=type_vocab),
      out_shape=jax.ShapeDtypeStruct((rows, H), wtab.dtype),
      grid_spec=pltpu.PrefetchScalarGridSpec(
          num_scalar_prefetch=1,
          grid=grid,
          in_specs=[
              pl.BlockSpec(memory_space=pl.ANY),                      # word table (HBM)
              pl.BlockSpec((tm, H), lambda i, *_: (i % pos_blocks, 0)),  # position rows
              pl.BlockSpec((tm, 1), lambda i, *_: (i, 0)),            # token-type ids
              pl.BlockSpec((type_vocab, H), lambda i, *_: (0, 0)),    # token-type table
              pl.BlockSpec((1, H), lambda i, *_: (0, 0)),             # LN gamma
              pl.BlockSpec((1, H), lambda i, *_: (0, 0)),             # LN beta
          ],
          out_specs=pl.BlockSpec((tm, H), lambda i, *_: (i, 0)),
          scratch_shapes=[
              pltpu.VMEM((tm, H), wtab.dtype),          # word gather buffer
              pltpu.SemaphoreType.DMA((1,)),            # one sem, aggregated wait
          ]),
      compiler_params=pltpu.CompilerParams(
          dimension_semantics=("parallel",)),
      cost_estimate=cost,
  )(wid, wtab, pos_in, tid, ttab, gamma, beta)

  return out2d.reshape(B, S, H)


def _reference(input_ids, params, token_type_ids, position_ids, eps):
  we = params["word_embeddings"][input_ids]
  pe = params["position_embeddings"][position_ids]
  te = params["token_type_embeddings"][token_type_ids]
  x = (we + te + pe).astype(jnp.float32)
  mean = jnp.mean(x, axis=-1, keepdims=True)
  var = jnp.mean((x - mean) ** 2, axis=-1, keepdims=True)
  y = (x - mean) * lax.rsqrt(var + eps)
  return (y * params["ln_gamma"] + params["ln_beta"]).astype(
      params["word_embeddings"].dtype)


if __name__ == "__main__":
  B, S = 2, 16
  hidden = 128          # lane-dense (multiple of 128) output tile
  vocab = 512
  max_pos = 64
  type_vocab = 2
  eps = 1e-12

  key = jax.random.PRNGKey(0)
  k0, k1, k2, k3, k4 = jax.random.split(key, 5)

  input_ids = jax.random.randint(k0, (B, S), 0, vocab, dtype=jnp.int32)
  token_type_ids = jax.random.randint(k1, (B, S), 0, type_vocab,
                                      dtype=jnp.int32)

  params = {
      "word_embeddings": jax.random.normal(
          k2, (vocab, hidden), jnp.float32) * 0.05,
      "position_embeddings": jax.random.normal(
          k3, (max_pos, hidden), jnp.float32) * 0.05,
      "token_type_embeddings": jax.random.normal(
          k4, (type_vocab, hidden), jnp.float32) * 0.05,
      "ln_gamma": jnp.ones((hidden,), jnp.float32),
      "ln_beta": jnp.zeros((hidden,), jnp.float32),
  }

  # tm=8 gives a 4-step grid at these toy shapes (exercises the modulo
  # position BlockSpec and keeps both v7x TensorCores busy); at real BERT
  # shapes leave the default tm=512.
  out = bert_embeddings(input_ids, params, token_type_ids=token_type_ids,
                        eps=eps, tm=8)
  out = jax.block_until_ready(out)

  pos_ids = jnp.broadcast_to(jnp.arange(S, dtype=jnp.int32)[None, :], (B, S))
  ref = _reference(input_ids, params, token_type_ids, pos_ids, eps)

  assert out.shape == (B, S, hidden)
  assert jnp.allclose(out, ref, atol=1e-5, rtol=1e-5), "mismatch vs reference"
  print("KERNEL_OK")
</pallas_src>

<mosaic_0001>
module attributes {stable_mosaic.version = 11 : i64} {
  func.func @_bert_embeddings_kernel(%arg0: i32, %arg1: memref<32xi32, #tpu.memory_space<smem>>, %arg2: memref<512x128xf32, #tpu.memory_space<any>>, %arg3: memref<8x128xf32, #tpu.memory_space<vmem>>, %arg4: memref<8x1xi32, #tpu.memory_space<vmem>>, %arg5: memref<2x128xf32, #tpu.memory_space<vmem>>, %arg6: memref<1x128xf32, #tpu.memory_space<vmem>>, %arg7: memref<1x128xf32, #tpu.memory_space<vmem>>, %arg8: memref<8x128xf32, #tpu.memory_space<vmem>>, %arg9: memref<8x128xf32, #tpu.memory_space<vmem>>, %arg10: memref<1x!tpu.dma_semaphore, #tpu.memory_space<semaphore_mem>>) attributes {dimension_semantics = [#tpu.dimension_semantics<parallel>], iteration_bounds = array<i64: 4>, scalar_prefetch = 1 : i64, scratch_operands = 2 : i64, tpu.core_type = #tpu.core_type<tc>, window_params = [{}, {transform_indices = @transform_1, window_bounds = array<i64: 8, 128>}, {transform_indices = @transform_2, window_bounds = array<i64: 8, 1>}, {pipeline_mode = #tpu.pipeline_mode<synchronous>, transform_indices = @transform_3, window_bounds = array<i64: 2, 128>}, {pipeline_mode = #tpu.pipeline_mode<synchronous>, transform_indices = @transform_4, window_bounds = array<i64: 1, 128>}, {pipeline_mode = #tpu.pipeline_mode<synchronous>, transform_indices = @transform_5, window_bounds = array<i64: 1, 128>}, {transform_indices = @transform_6, window_bounds = array<i64: 8, 128>}]} {
    %c8_i32 = arith.constant 8 : i32
    %0 = arith.muli %arg0, %c8_i32 : i32
    %1 = tpu.assume_multiple %0, 8 : i32
    %c0_i32 = arith.constant 0 : i32
    %c8_i32_0 = arith.constant 8 : i32
    %2 = arith.muli %c0_i32, %c8_i32_0 : i32
    %3 = tpu.assume_multiple %2, 8 : i32
    %c0_i32_1 = arith.constant 0 : i32
    %4 = arith.addi %3, %c0_i32_1 : i32
    %5 = arith.addi %1, %4 : i32
    %6 = arith.index_cast %5 : i32 to index
    %7 = memref.load %arg1[%6] : memref<32xi32, #tpu.memory_space<smem>>
    %c0_i32_2 = arith.constant 0 : i32
    %c0_i32_3 = arith.constant 0 : i32
    %8 = tpu.memref_slice %arg2[%7, %c0_i32_3] : memref<512x128xf32, #tpu.memory_space<any>> -> memref<1x128xf32, #tpu.memory_space<any>>
    %c0_i32_4 = arith.constant 0 : i32
    %9 = tpu.memref_slice %arg9[%4, %c0_i32_4] : memref<8x128xf32, #tpu.memory_space<vmem>> -> memref<1x128xf32, #tpu.memory_space<vmem>>
    %10 = tpu.memref_slice %arg10[%c0_i32_2] : memref<1x!tpu.dma_semaphore, #tpu.memory_space<semaphore_mem>> -> memref<1x!tpu.dma_semaphore, #tpu.memory_space<semaphore_mem>>
    %11 = tpu.memref_squeeze %10 : memref<1x!tpu.dma_semaphore, #tpu.memory_space<semaphore_mem>> -> memref<!tpu.dma_semaphore, #tpu.memory_space<semaphore_mem>>
    tpu.enqueue_dma source(%8 : memref<1x128xf32, #tpu.memory_space<any>>) target(%9 : memref<1x128xf32, #tpu.memory_space<vmem>>) target_semaphore(%11 : memref<!tpu.dma_semaphore, #tpu.memory_space<semaphore_mem>>)
    %c1_i32 = arith.constant 1 : i32
    %12 = arith.addi %3, %c1_i32 : i32
    %13 = arith.addi %1, %12 : i32
    %14 = arith.index_cast %13 : i32 to index
    %15 = memref.load %arg1[%14] : memref<32xi32, #tpu.memory_space<smem>>
    %c0_i32_5 = arith.constant 0 : i32
    %c0_i32_6 = arith.constant 0 : i32
    %16 = tpu.memref_slice %arg2[%15, %c0_i32_6] : memref<512x128xf32, #tpu.memory_space<any>> -> memref<1x128xf32, #tpu.memory_space<any>>
    %c0_i32_7 = arith.constant 0 : i32
    %17 = tpu.memref_slice %arg9[%12, %c0_i32_7] : memref<8x128xf32, #tpu.memory_space<vmem>> -> memref<1x128xf32, #tpu.memory_space<vmem>>
    %18 = tpu.memref_slice %arg10[%c0_i32_5] : memref<1x!tpu.dma_semaphore, #tpu.memory_space<semaphore_mem>> -> memref<1x!tpu.dma_semaphore, #tpu.memory_space<semaphore_mem>>
    %19 = tpu.memref_squeeze %18 : memref<1x!tpu.dma_semaphore, #tpu.memory_space<semaphore_mem>> -> memref<!tpu.dma_semaphore, #tpu.memory_space<semaphore_mem>>
    tpu.enqueue_dma source(%16 : memref<1x128xf32, #tpu.memory_space<any>>) target(%17 : memref<1x128xf32, #tpu.memory_space<vmem>>) target_semaphore(%19 : memref<!tpu.dma_semaphore, #tpu.memory_space<semaphore_mem>>)
    %c2_i32 = arith.constant 2 : i32
    %20 = arith.addi %3, %c2_i32 : i32
    %21 = arith.addi %1, %20 : i32
    %22 = arith.index_cast %21 : i32 to index
    %23 = memref.load %arg1[%22] : memref<32xi32, #tpu.memory_space<smem>>
    %c0_i32_8 = arith.constant 0 : i32
    %c0_i32_9 = arith.constant 0 : i32
    %24 = tpu.memref_slice %arg2[%23, %c0_i32_9] : memref<512x128xf32, #tpu.memory_space<any>> -> memref<1x128xf32, #tpu.memory_space<any>>
    %c0_i32_10 = arith.constant 0 : i32
    %25 = tpu.memref_slice %arg9[%20, %c0_i32_10] : memref<8x128xf32, #tpu.memory_space<vmem>> -> memref<1x128xf32, #tpu.memory_space<vmem>>
    %26 = tpu.memref_slice %arg10[%c0_i32_8] : memref<1x!tpu.dma_semaphore, #tpu.memory_space<semaphore_mem>> -> memref<1x!tpu.dma_semaphore, #tpu.memory_space<semaphore_mem>>
    %27 = tpu.memref_squeeze %26 : memref<1x!tpu.dma_semaphore, #tpu.memory_space<semaphore_mem>> -> memref<!tpu.dma_semaphore, #tpu.memory_space<semaphore_mem>>
    tpu.enqueue_dma source(%24 : memref<1x128xf32, #tpu.memory_space<any>>) target(%25 : memref<1x128xf32, #tpu.memory_space<vmem>>) target_semaphore(%27 : memref<!tpu.dma_semaphore, #tpu.memory_space<semaphore_mem>>)
    %c3_i32 = arith.constant 3 : i32
    %28 = arith.addi %3, %c3_i32 : i32
    %29 = arith.addi %1, %28 : i32
    %30 = arith.index_cast %29 : i32 to index
    %31 = memref.load %arg1[%30] : memref<32xi32, #tpu.memory_space<smem>>
    %c0_i32_11 = arith.constant 0 : i32
    %c0_i32_12 = arith.constant 0 : i32
    %32 = tpu.memref_slice %arg2[%31, %c0_i32_12] : memref<512x128xf32, #tpu.memory_space<any>> -> memref<1x128xf32, #tpu.memory_space<any>>
    %c0_i32_13 = arith.constant 0 : i32
    %33 = tpu.memref_slice %arg9[%28, %c0_i32_13] : memref<8x128xf32, #tpu.memory_space<vmem>> -> memref<1x128xf32, #tpu.memory_space<vmem>>
    %34 = tpu.memref_slice %arg10[%c0_i32_11] : memref<1x!tpu.dma_semaphore, #tpu.memory_space<semaphore_mem>> -> memref<1x!tpu.dma_semaphore, #tpu.memory_space<semaphore_mem>>
    %35 = tpu.memref_squeeze %34 : memref<1x!tpu.dma_semaphore, #tpu.memory_space<semaphore_mem>> -> memref<!tpu.dma_semaphore, #tpu.memory_space<semaphore_mem>>
    tpu.enqueue_dma source(%32 : memref<1x128xf32, #tpu.memory_space<any>>) target(%33 : memref<1x128xf32, #tpu.memory_space<vmem>>) target_semaphore(%35 : memref<!tpu.dma_semaphore, #tpu.memory_space<semaphore_mem>>)
    %c4_i32 = arith.constant 4 : i32
    %36 = arith.addi %3, %c4_i32 : i32
    %37 = arith.addi %1, %36 : i32
    %38 = arith.index_cast %37 : i32 to index
    %39 = memref.load %arg1[%38] : memref<32xi32, #tpu.memory_space<smem>>
    %c0_i32_14 = arith.constant 0 : i32
    %c0_i32_15 = arith.constant 0 : i32
    %40 = tpu.memref_slice %arg2[%39, %c0_i32_15] : memref<512x128xf32, #tpu.memory_space<any>> -> memref<1x128xf32, #tpu.memory_space<any>>
    %c0_i32_16 = arith.constant 0 : i32
    %41 = tpu.memref_slice %arg9[%36, %c0_i32_16] : memref<8x128xf32, #tpu.memory_space<vmem>> -> memref<1x128xf32, #tpu.memory_space<vmem>>
    %42 = tpu.memref_slice %arg10[%c0_i32_14] : memref<1x!tpu.dma_semaphore, #tpu.memory_space<semaphore_mem>> -> memref<1x!tpu.dma_semaphore, #tpu.memory_space<semaphore_mem>>
    %43 = tpu.memref_squeeze %42 : memref<1x!tpu.dma_semaphore, #tpu.memory_space<semaphore_mem>> -> memref<!tpu.dma_semaphore, #tpu.memory_space<semaphore_mem>>
    tpu.enqueue_dma source(%40 : memref<1x128xf32, #tpu.memory_space<any>>) target(%41 : memref<1x128xf32, #tpu.memory_space<vmem>>) target_semaphore(%43 : memref<!tpu.dma_semaphore, #tpu.memory_space<semaphore_mem>>)
    %c5_i32 = arith.constant 5 : i32
    %44 = arith.addi %3, %c5_i32 : i32
    %45 = arith.addi %1, %44 : i32
    %46 = arith.index_cast %45 : i32 to index
    %47 = memref.load %arg1[%46] : memref<32xi32, #tpu.memory_space<smem>>
    %c0_i32_17 = arith.constant 0 : i32
    %c0_i32_18 = arith.constant 0 : i32
    %48 = tpu.memref_slice %arg2[%47, %c0_i32_18] : memref<512x128xf32, #tpu.memory_space<any>> -> memref<1x128xf32, #tpu.memory_space<any>>
    %c0_i32_19 = arith.constant 0 : i32
    %49 = tpu.memref_slice %arg9[%44, %c0_i32_19] : memref<8x128xf32, #tpu.memory_space<vmem>> -> memref<1x128xf32, #tpu.memory_space<vmem>>
    %50 = tpu.memref_slice %arg10[%c0_i32_17] : memref<1x!tpu.dma_semaphore, #tpu.memory_space<semaphore_mem>> -> memref<1x!tpu.dma_semaphore, #tpu.memory_space<semaphore_mem>>
    %51 = tpu.memref_squeeze %50 : memref<1x!tpu.dma_semaphore, #tpu.memory_space<semaphore_mem>> -> memref<!tpu.dma_semaphore, #tpu.memory_space<semaphore_mem>>
    tpu.enqueue_dma source(%48 : memref<1x128xf32, #tpu.memory_space<any>>) target(%49 : memref<1x128xf32, #tpu.memory_space<vmem>>) target_semaphore(%51 : memref<!tpu.dma_semaphore, #tpu.memory_space<semaphore_mem>>)
    %c6_i32 = arith.constant 6 : i32
    %52 = arith.addi %3, %c6_i32 : i32
    %53 = arith.addi %1, %52 : i32
    %54 = arith.index_cast %53 : i32 to index
    %55 = memref.load %arg1[%54] : memref<32xi32, #tpu.memory_space<smem>>
    %c0_i32_20 = arith.constant 0 : i32
    %c0_i32_21 = arith.constant 0 : i32
    %56 = tpu.memref_slice %arg2[%55, %c0_i32_21] : memref<512x128xf32, #tpu.memory_space<any>> -> memref<1x128xf32, #tpu.memory_space<any>>
    %c0_i32_22 = arith.constant 0 : i32
    %57 = tpu.memref_slice %arg9[%52, %c0_i32_22] : memref<8x128xf32, #tpu.memory_space<vmem>> -> memref<1x128xf32, #tpu.memory_space<vmem>>
    %58 = tpu.memref_slice %arg10[%c0_i32_20] : memref<1x!tpu.dma_semaphore, #tpu.memory_space<semaphore_mem>> -> memref<1x!tpu.dma_semaphore, #tpu.memory_space<semaphore_mem>>
    %59 = tpu.memref_squeeze %58 : memref<1x!tpu.dma_semaphore, #tpu.memory_space<semaphore_mem>> -> memref<!tpu.dma_semaphore, #tpu.memory_space<semaphore_mem>>
    tpu.enqueue_dma source(%56 : memref<1x128xf32, #tpu.memory_space<any>>) target(%57 : memref<1x128xf32, #tpu.memory_space<vmem>>) target_semaphore(%59 : memref<!tpu.dma_semaphore, #tpu.memory_space<semaphore_mem>>)
    %c7_i32 = arith.constant 7 : i32
    %60 = arith.addi %3, %c7_i32 : i32
    %61 = arith.addi %1, %60 : i32
    %62 = arith.index_cast %61 : i32 to index
    %63 = memref.load %arg1[%62] : memref<32xi32, #tpu.memory_space<smem>>
    %c0_i32_23 = arith.constant 0 : i32
    %c0_i32_24 = arith.constant 0 : i32
    %64 = tpu.memref_slice %arg2[%63, %c0_i32_24] : memref<512x128xf32, #tpu.memory_space<any>> -> memref<1x128xf32, #tpu.memory_space<any>>
    %c0_i32_25 = arith.constant 0 : i32
    %65 = tpu.memref_slice %arg9[%60, %c0_i32_25] : memref<8x128xf32, #tpu.memory_space<vmem>> -> memref<1x128xf32, #tpu.memory_space<vmem>>
    %66 = tpu.memref_slice %arg10[%c0_i32_23] : memref<1x!tpu.dma_semaphore, #tpu.memory_space<semaphore_mem>> -> memref<1x!tpu.dma_semaphore, #tpu.memory_space<semaphore_mem>>
    %67 = tpu.memref_squeeze %66 : memref<1x!tpu.dma_semaphore, #tpu.memory_space<semaphore_mem>> -> memref<!tpu.dma_semaphore, #tpu.memory_space<semaphore_mem>>
    tpu.enqueue_dma source(%64 : memref<1x128xf32, #tpu.memory_space<any>>) target(%65 : memref<1x128xf32, #tpu.memory_space<vmem>>) target_semaphore(%67 : memref<!tpu.dma_semaphore, #tpu.memory_space<semaphore_mem>>)
    %c1_i32_26 = arith.constant 1 : i32
    %c0 = arith.constant 0 : index
    %c0_27 = arith.constant 0 : index
    %68 = vector.load %arg4[%c0, %c0_27] : memref<8x1xi32, #tpu.memory_space<vmem>>, vector<8x1xi32>
    %c0_i32_28 = arith.constant 0 : i32
    %69 = vector.broadcast %c0_i32_28 : i32 to vector<8x1xi32>
    %70 = arith.cmpi eq, %68, %69 : vector<8x1xi32>
    %71 = arith.extui %70 : vector<8x1xi1> to vector<8x1xi32>
    %72 = arith.sitofp %71 : vector<8x1xi32> to vector<8x1xf32>
    %c0_29 = arith.constant 0 : index
    %c0_30 = arith.constant 0 : index
    %73 = vector.load %arg5[%c0_29, %c0_30] : memref<2x128xf32, #tpu.memory_space<vmem>>, vector<1x128xf32>
    %74 = vector.broadcast %72 : vector<8x1xf32> to vector<8x128xf32>
    %75 = vector.broadcast %73 : vector<1x128xf32> to vector<8x128xf32>
    %76 = arith.mulf %74, %75 : vector<8x128xf32>
    %c1_i32_31 = arith.constant 1 : i32
    %77 = vector.broadcast %c1_i32_31 : i32 to vector<8x1xi32>
    %78 = arith.cmpi eq, %68, %77 : vector<8x1xi32>
    %79 = arith.extui %78 : vector<8x1xi1> to vector<8x1xi32>
    %80 = arith.sitofp %79 : vector<8x1xi32> to vector<8x1xf32>
    %c1 = arith.constant 1 : index
    %c0_32 = arith.constant 0 : index
    %81 = vector.load %arg5[%c1, %c0_32] : memref<2x128xf32, #tpu.memory_space<vmem>>, vector<1x128xf32>
    %82 = vector.broadcast %80 : vector<8x1xf32> to vector<8x128xf32>
    %83 = vector.broadcast %81 : vector<1x128xf32> to vector<8x128xf32>
    %84 = arith.mulf %82, %83 : vector<8x128xf32>
    %85 = arith.addf %76, %84 : vector<8x128xf32>
    %c0_33 = arith.constant 0 : index
    %c0_34 = arith.constant 0 : index
    %86 = vector.load %arg3[%c0_33, %c0_34] : memref<8x128xf32, #tpu.memory_space<vmem>>, vector<8x128xf32>
    %c0_35 = arith.constant 0 : index
    %c0_36 = arith.constant 0 : index
    %87 = vector.load %arg6[%c0_35, %c0_36] : memref<1x128xf32, #tpu.memory_space<vmem>>, vector<1x128xf32>
    %c0_37 = arith.constant 0 : index
    %c0_38 = arith.constant 0 : index
    %88 = vector.load %arg7[%c0_37, %c0_38] : memref<1x128xf32, #tpu.memory_space<vmem>>, vector<1x128xf32>
    %c0_i32_39 = arith.constant 0 : i32
    %c0_i32_40 = arith.constant 0 : i32
    %c0_i32_41 = arith.constant 0 : i32
    %89 = tpu.memref_slice %arg2[%c0_i32_40, %c0_i32_41] : memref<512x128xf32, #tpu.memory_space<any>> -> memref<8x128xf32, #tpu.memory_space<any>>
    %90 = tpu.memref_slice %arg10[%c0_i32_39] : memref<1x!tpu.dma_semaphore, #tpu.memory_space<semaphore_mem>> -> memref<1x!tpu.dma_semaphore, #tpu.memory_space<semaphore_mem>>
    %91 = tpu.memref_squeeze %90 : memref<1x!tpu.dma_semaphore, #tpu.memory_space<semaphore_mem>> -> memref<!tpu.dma_semaphore, #tpu.memory_space<semaphore_mem>>
    tpu.wait_dma2 semaphore(%91 : memref<!tpu.dma_semaphore, #tpu.memory_space<semaphore_mem>>) src(%89 : memref<8x128xf32, #tpu.memory_space<any>>) dst(%arg9 : memref<8x128xf32, #tpu.memory_space<vmem>>)
    %c0_42 = arith.constant 0 : index
    %c0_43 = arith.constant 0 : index
    %92 = vector.load %arg9[%c0_42, %c0_43] : memref<8x128xf32, #tpu.memory_space<vmem>>, vector<8x128xf32>
    %93 = arith.addf %92, %85 : vector<8x128xf32>
    %94 = arith.addf %93, %86 : vector<8x128xf32>
    %cst = arith.constant dense<0.000000e+00> : vector<8xf32>
    %95 = vector.multi_reduction <add>, %94, %cst [1] : vector<8x128xf32> to vector<8xf32>
    %96 = vector.shape_cast %95 : vector<8xf32> to vector<8x1xf32>
    %cst_44 = arith.constant 1.280000e+02 : f32
    %97 = vector.broadcast %cst_44 : f32 to vector<8x1xf32>
    %98 = arith.divf %96, %97 : vector<8x1xf32>
    %99 = vector.broadcast %98 : vector<8x1xf32> to vector<8x128xf32>
    %100 = arith.subf %94, %99 : vector<8x128xf32>
    %101 = arith.mulf %100, %100 : vector<8x128xf32>
    %cst_45 = arith.constant dense<0.000000e+00> : vector<8xf32>
    %102 = vector.multi_reduction <add>, %101, %cst_45 [1] : vector<8x128xf32> to vector<8xf32>
    %103 = vector.shape_cast %102 : vector<8xf32> to vector<8x1xf32>
    %cst_46 = arith.constant 1.280000e+02 : f32
    %104 = vector.broadcast %cst_46 : f32 to vector<8x1xf32>
    %105 = arith.divf %103, %104 : vector<8x1xf32>
    %cst_47 = arith.constant 9.99999996E-13 : f32
    %106 = vector.broadcast %cst_47 : f32 to vector<8x1xf32>
    %107 = arith.addf %105, %106 : vector<8x1xf32>
    %108 = math.rsqrt %107 : vector<8x1xf32>
    %109 = vector.broadcast %108 : vector<8x1xf32> to vector<8x128xf32>
    %110 = arith.mulf %100, %109 : vector<8x128xf32>
    %111 = vector.broadcast %87 : vector<1x128xf32> to vector<8x128xf32>
    %112 = arith.mulf %110, %111 : vector<8x128xf32>
    %113 = vector.broadcast %88 : vector<1x128xf32> to vector<8x128xf32>
    %114 = arith.addf %112, %113 : vector<8x128xf32>
    %c0_48 = arith.constant 0 : index
    %c0_49 = arith.constant 0 : index
    %115 = vector.load %arg8[%c0_48, %c0_49] : memref<8x128xf32, #tpu.memory_space<vmem>>, vector<8x128xf32>
    tpu.vector_store %arg8[%c0_48, %c0_49], %114 {strides = array<i32>} : memref<8x128xf32, #tpu.memory_space<vmem>>, vector<8x128xf32>,
    return
  }
  func.func @transform_1(%arg0: i32, %arg1: memref<32xi32, #tpu.memory_space<smem>>) -> (i32, i32) {
    %c2_i32 = arith.constant 2 : i32
    %c0_i32 = arith.constant 0 : i32
    %0 = arith.cmpi eq, %c2_i32, %c0_i32 : i32
    %c1_i32 = arith.constant 1 : i32
    %1 = arith.select %0, %c1_i32, %c2_i32 : i32
    %2 = arith.remsi %arg0, %1 : i32
    %c0_i32_0 = arith.constant 0 : i32
    %3 = arith.cmpi ne, %2, %c0_i32_0 : i32
    %c0_i32_1 = arith.constant 0 : i32
    %4 = arith.cmpi slt, %2, %c0_i32_1 : i32
    %c0_i32_2 = arith.constant 0 : i32
    %5 = arith.cmpi slt, %1, %c0_i32_2 : i32
    %6 = arith.xori %4, %5 : i1
    %7 = arith.andi %6, %3 : i1
    %8 = arith.addi %2, %1 : i32
    %9 = arith.select %7, %8, %2 : i32
    %c0_i32_3 = arith.constant 0 : i32
    %c0_i32_4 = arith.constant 0 : i32
    return %9, %c0_i32_3 : i32, i32
  }
  func.func @transform_2(%arg0: i32, %arg1: memref<32xi32, #tpu.memory_space<smem>>) -> (i32, i32) {
    %c0_i32 = arith.constant 0 : i32
    %c0_i32_0 = arith.constant 0 : i32
    return %arg0, %c0_i32 : i32, i32
  }
  func.func @transform_3(%arg0: i32, %arg1: memref<32xi32, #tpu.memory_space<smem>>) -> (i32, i32) {
    %c0_i32 = arith.constant 0 : i32
    %c0_i32_0 = arith.constant 0 : i32
    %c0_i32_1 = arith.constant 0 : i32
    return %c0_i32, %c0_i32_0 : i32, i32
  }
  func.func @transform_4(%arg0: i32, %arg1: memref<32xi32, #tpu.memory_space<smem>>) -> (i32, i32) {
    %c0_i32 = arith.constant 0 : i32
    %c0_i32_0 = arith.constant 0 : i32
    %c0_i32_1 = arith.constant 0 : i32
    return %c0_i32, %c0_i32_0 : i32, i32
  }
  func.func @transform_5(%arg0: i32, %arg1: memref<32xi32, #tpu.memory_space<smem>>) -> (i32, i32) {
    %c0_i32 = arith.constant 0 : i32
    %c0_i32_0 = arith.constant 0 : i32
    %c0_i32_1 = arith.constant 0 : i32
    return %c0_i32, %c0_i32_0 : i32, i32
  }
  func.func @transform_6(%arg0: i32, %arg1: memref<32xi32, #tpu.memory_space<smem>>) -> (i32, i32) {
    %c0_i32 = arith.constant 0 : i32
    %c0_i32_0 = arith.constant 0 : i32
    return %arg0, %c0_i32 : i32, i32
  }
}

</mosaic_0001>

<llo_original>
// kernel: tpu_custom_call.1
$region0: #{tpu_custom_call.1}
  #allocation0 [shape = 'u32[]', space=smem, size = 0x4, offset = 0x4, fixed_abs, tag = 'smem constant byte address 0x4 - core index']
  #allocation1 [shape = 'u32[144,128]{1,0:T(1,128)}', space=vmem, size = 0x12000, scoped, tag = 'internal scratch']
  #allocation2 [shape = 'f32[8,128]{1,0:T(8,128)}', space=vmem, size = 0x1000, scoped, tag = 'scratch operand']
  #allocation3 [shape = 's32[1]{0}', space=sflag, size = 0x4, scoped, tag = 'scratch operand']
  #allocation4 [shape = 's32[1]{0}', space=sflag, size = 0x4, scoped, tag = 'scoped memory for tpu_custom_call.1']
  #allocation5 [shape = 'u8[512]{0}', space=smem, size = 0x200, scoped, tag = 'prefetched SMEM operand 0']
  #allocation8 [shape = 's32[]', space=sflag, size = 0x4, offset = 0, fixed_abs, tag = 'sflag constant byte address 0x0 - dummy sync flag']
  #allocation9 [shape = 's32[]', space=sflag, size = 0x4, offset = 0, fixed_abs, tag = 'sflag constant byte address 0x0 - dummy sync flag']
  #allocation10 [shape = 'u32[]', space=smem, size = 0x4, offset = 0x44, fixed_abs, tag = 'smem constant byte address 0x44 - assertion arg 0']
  #allocation11 [shape = 'u32[]', space=smem, size = 0x4, offset = 0x48, fixed_abs, tag = 'smem constant byte address 0x48 - assertion arg 1']
  #allocation12 [shape = 's32[]', space=sflag, size = 0x4, offset = 0, fixed_abs, tag = 'sflag constant byte address 0x0 - dummy sync flag']
  #allocation13 [shape = 's32[]', space=sflag, size = 0x4, offset = 0, fixed_abs, tag = 'sflag constant byte address 0x0 - dummy sync flag']
  #allocation14 [shape = 's32[]', space=sflag, size = 0x4, offset = 0, fixed_abs, tag = 'sflag constant byte address 0x0 - dummy sync flag']
  #allocation15 [shape = 's32[]', space=sflag, size = 0x4, offset = 0, fixed_abs, tag = 'sflag constant byte address 0x0 - dummy sync flag']
  #allocation16 [shape = 's32[]', space=sflag, size = 0x4, offset = 0, fixed_abs, tag = 'sflag constant byte address 0x0 - dummy sync flag']
  #allocation17 [shape = 's32[]', space=sflag, size = 0x4, offset = 0, fixed_abs, tag = 'sflag constant byte address 0x0 - dummy sync flag']
  #allocation18 [shape = 's32[]', space=sflag, size = 0x4, offset = 0, fixed_abs, tag = 'sflag constant byte address 0x0 - dummy sync flag']
  #allocation19 [shape = 's32[]', space=sflag, size = 0x4, offset = 0, fixed_abs, tag = 'sflag constant byte address 0x0 - dummy sync flag']
  #allocation20 [shape = 's32[]', space=sflag, size = 0x4, offset = 0, fixed_abs, tag = 'sflag constant byte address 0x0 - dummy sync flag']
  #allocation21 [shape = 's32[]', space=sflag, size = 0x4, offset = 0, fixed_abs, tag = 'sflag constant byte address 0x0 - dummy sync flag']
  #allocation22 [shape = 's32[]', space=sflag, size = 0x4, offset = 0, fixed_abs, tag = 'sflag constant byte address 0x0 - dummy sync flag']
  #allocation23 [shape = 's32[]', space=sflag, size = 0x4, offset = 0, fixed_abs, tag = 'sflag constant byte address 0x0 - dummy sync flag']
  #allocation24 [shape = 's32[]', space=sflag, size = 0x4, offset = 0, fixed_abs, tag = 'sflag constant byte address 0x0 - dummy sync flag']
  #allocation25 [shape = 's32[]', space=sflag, size = 0x4, offset = 0, fixed_abs, tag = 'sflag constant byte address 0x0 - dummy sync flag']
  %s0 = inlined_call_operand.vmem [shape: s32[32], index: 0, kind: input, shape index: {}]
  %s1 = inlined_call_operand.hbm [shape: f32[512,128], index: 1, kind: input, shape index: {}]
  %s2 = inlined_call_operand.vmem [shape: f32[16,128], index: 2, kind: input, shape index: {}]
  %s3 = inlined_call_operand.vmem [shape: s32[32,1], index: 3, kind: input, shape index: {}]
  %s4 = inlined_call_operand.vmem [shape: f32[2,128], index: 4, kind: input, shape index: {}]
  %s5 = inlined_call_operand.vmem [shape: f32[1,128], index: 5, kind: input, shape index: {}]
  %s6 = inlined_call_operand.vmem [shape: f32[1,128], index: 6, kind: input, shape index: {}]
  %s7 = inlined_call_operand.hbm [shape: f32[32,128], index: 7, kind: output, shape index: {}]
  %s8 = sld [smem:[#allocation0]]
  $region85: #{tpu_custom_call.1} parent=0
    _
  %s10 = ssub.s32 1, %s8
  %s11 = scalar_select 0, %s10, %s8
  %s12 = sshll.u32 %s0, 4
  %s13 = int_to_ptr.vmem [resolvable:$true] %s12
  %15 = dma.vmem_to_smem %s13, 16, [#allocation5], [#allocation4]
  %16 = dma.done [#allocation4], 16
  %17 = sfence
  $region1: #{tpu_custom_call.1} parent=0
    #allocation6 [shape = 'u8[8192]{0}', space=vmem, size = 0x2000, scoped, tag = 'output window, operand 0']
    #allocation7 [shape = 's32[2]{0}', space=sflag, size = 0x8, scoped, tag = 'scoped memory for tpu_custom_call.1']
    %18 = vsyncpa [#allocation7], 0
    %s19 = scalar_lea.sflag [#allocation7], 1
    %20 = vsyncpa %s19, 0
    loop: start=0, step=1, limit=6
    $region2: #{tpu_custom_call.1} parent=1 // loop_pre_header
      _
    $region3: #{tpu_custom_call.1} parent=1 // loop_header
      %s22 = sphi 0, %s26
      %p23 = scmp.ge.s32.totalorder %s22, 6
      %s56 = sphi 0, %s58
      %s59 = sphi 0, %s56
      %s60 = sphi 0, %s59
      %s76 = sphi 0, %s60
      %s82 = sphi 0, %s84
      %s85 = sphi 0, %s82
      %s86 = sphi 0, %s85
      %s102 = sphi 0, %s86
      %s106 = sphi 0, %s106
      %s108 = sphi 0, %s106
      %s109 = sphi 0, %s108
      %s123 = sphi 0, %s109
      %s127 = sphi 0, %s127
      %s129 = sphi 0, %s127
      %s130 = sphi 0, %s129
      %s144 = sphi 0, %s130
      %s148 = sphi 0, %s148
      %s150 = sphi 0, %s148
      %s151 = sphi 0, %s150
      %s165 = sphi 0, %s151
      %s171 = sphi 0, %s173
      %s174 = sphi 0, %s171
      %s175 = sphi 0, %s174
      %s191 = sphi 0, %s175
    $region4: #{tpu_custom_call.1} parent=1 // loop_header_branch
      %25 = sbr.rel (%p23) target = $region8
    $region5: #{tpu_custom_call.1} parent=1 // loop_body
      %s27 = ssub.s32 %s22, 1
      %s28 = ssub.s32 %s22, 2
      %s29 = sadd.s32 %s22, 1
      %p30 = scmp.lt.s32.totalorder %s22, 0
      %s31 = ssub.s32 0, %s22
      %s32 = scalar_select %p30, %s31, %s22
      %s33 = sand.u32 %s32, 1
      %s34 = ssub.s32 0, %s33
      %s35 = scalar_select %p30, %s34, %s33
      %p36 = scmp.ne.s32.totalorder %s35, 0
      %p37 = scmp.lt.s32.totalorder %s35, 0
      %p38 = pnand %p37, %p36
      %p39 = pneg %p38
      %s40 = sadd.s32 %s35, 2
      %s41 = scalar_select %p39, %s40, %s35
      %p42 = scmp.lt.s32.totalorder %s29, 0
      %s43 = ssub.s32 0, %s29
      %s44 = scalar_select %p42, %s43, %s29
      %s45 = sand.u32 %s44, 1
      %s46 = ssub.s32 0, %s45
      %s47 = scalar_select %p42, %s46, %s45
      %p48 = scmp.ne.s32.totalorder %s47, 0
      %p49 = scmp.lt.s32.totalorder %s47, 0
      %p50 = pnand %p49, %p48
      %p51 = pneg %p50
      %s52 = sadd.s32 %s47, 2
      %s53 = scalar_select %p51, %s52, %s47
      %s54 = ssub.s32 %s41, %s53
      %p55 = scmp.eq.s32.totalorder %s54, 0
      %s57 = sadd.s32 %s56, 1
      %s58 = scalar_select %p55, %s56, %s57
      %p61 = pneg %p55
      %p62 = scmp.eq.s32.totalorder %s22, 3
      %p63 = por %p61, %p62
      %p64 = scmp.ne.s32.totalorder %s56, %s59
      %p65 = scmp.eq.s32.totalorder %s22, 0
      %p66 = por %p64, %p65
      %p67 = scmp.ne.s32.totalorder %s56, %s59
      %p68 = scmp.eq.s32.totalorder %s27, 3
      %p69 = por %p67, %p68
      %p70 = scmp.ne.s32.totalorder %s59, %s60
      %p71 = scmp.eq.s32.totalorder %s27, 0
      %p72 = por %p70, %p71
      %p73 = scmp.ne.s32.totalorder %s59, %s60
      %p74 = scmp.eq.s32.totalorder %s28, 3
      %p75 = por %p73, %p74
      %p77 = scmp.ne.s32.totalorder %s60, %s76
      %p78 = scmp.eq.s32.totalorder %s28, 0
      %p79 = por %p77, %p78
      %s80 = ssub.s32 %s22, %s29
      %p81 = scmp.eq.s32.totalorder %s80, 0
      %s83 = sadd.s32 %s82, 1
      %s84 = scalar_select %p81, %s82, %s83
      %p87 = pneg %p81
      %p88 = scmp.eq.s32.totalorder %s22, 3
      %p89 = por %p87, %p88
      %p90 = scmp.ne.s32.totalorder %s82, %s85
      %p91 = scmp.eq.s32.totalorder %s22, 0
      %p92 = por %p90, %p91
      %p93 = scmp.ne.s32.totalorder %s82, %s85
      %p94 = scmp.eq.s32.totalorder %s27, 3
      %p95 = por %p93, %p94
      %p96 = scmp.ne.s32.totalorder %s85, %s86
      %p97 = scmp.eq.s32.totalorder %s27, 0
      %p98 = por %p96, %p97
      %p99 = scmp.ne.s32.totalorder %s85, %s86
      %p100 = scmp.eq.s32.totalorder %s28, 3
      %p101 = por %p99, %p100
      %p103 = scmp.ne.s32.totalorder %s86, %s102
      %p104 = scmp.eq.s32.totalorder %s28, 0
      %p105 = por %p103, %p104
      %s107 = sadd.s32 %s106, 1
      %p110 = scmp.eq.s32.totalorder %s22, 3
      %p111 = scmp.ne.s32.totalorder %s106, %s108
      %p112 = scmp.eq.s32.totalorder %s22, 0
      %p113 = por %p111, %p112
      %p114 = scmp.ne.s32.totalorder %s106, %s108
      %p115 = scmp.eq.s32.totalorder %s27, 3
      %p116 = por %p114, %p115
      %p117 = scmp.ne.s32.totalorder %s108, %s109
      %p118 = scmp.eq.s32.totalorder %s27, 0
      %p119 = por %p117, %p118
      %p120 = scmp.ne.s32.totalorder %s108, %s109
      %p121 = scmp.eq.s32.totalorder %s28, 3
      %p122 = por %p120, %p121
      %p124 = scmp.ne.s32.totalorder %s109, %s123
      %p125 = scmp.eq.s32.totalorder %s28, 0
      %p126 = por %p124, %p125
      %s128 = sadd.s32 %s127, 1
      %p131 = scmp.eq.s32.totalorder %s22, 3
      %p132 = scmp.ne.s32.totalorder %s127, %s129
      %p133 = scmp.eq.s32.totalorder %s22, 0
      %p134 = por %p132, %p133
      %p135 = scmp.ne.s32.totalorder %s127, %s129
      %p136 = scmp.eq.s32.totalorder %s27, 3
      %p137 = por %p135, %p136
      %p138 = scmp.ne.s32.totalorder %s129, %s130
      %p139 = scmp.eq.s32.totalorder %s27, 0
      %p140 = por %p138, %p139
      %p141 = scmp.ne.s32.totalorder %s129, %s130
      %p142 = scmp.eq.s32.totalorder %s28, 3
      %p143 = por %p141, %p142
      %p145 = scmp.ne.s32.totalorder %s130, %s144
      %p146 = scmp.eq.s32.totalorder %s28, 0
      %p147 = por %p145, %p146
      %s149 = sadd.s32 %s148, 1
      %p152 = scmp.eq.s32.totalorder %s22, 3
      %p153 = scmp.ne.s32.totalorder %s148, %s150
      %p154 = scmp.eq.s32.totalorder %s22, 0
      %p155 = por %p153, %p154
      %p156 = scmp.ne.s32.totalorder %s148, %s150
      %p157 = scmp.eq.s32.totalorder %s27, 3
      %p158 = por %p156, %p157
      %p159 = scmp.ne.s32.totalorder %s150, %s151
      %p160 = scmp.eq.s32.totalorder %s27, 0
      %p161 = por %p159, %p160
      %p162 = scmp.ne.s32.totalorder %s150, %s151
      %p163 = scmp.eq.s32.totalorder %s28, 3
      %p164 = por %p162, %p163
      %p166 = scmp.ne.s32.totalorder %s151, %s165
      %p167 = scmp.eq.s32.totalorder %s28, 0
      %p168 = por %p166, %p167
      %s169 = ssub.s32 %s22, %s29
      %p170 = scmp.eq.s32.totalorder %s169, 0
      %s172 = sadd.s32 %s171, 1
      %s173 = scalar_select %p170, %s171, %s172
      %p176 = pneg %p170
      %p177 = scmp.eq.s32.totalorder %s22, 3
      %p178 = por %p176, %p177
      %p179 = scmp.ne.s32.totalorder %s171, %s174
      %p180 = scmp.eq.s32.totalorder %s22, 0
      %p181 = por %p179, %p180
      %p182 = scmp.ne.s32.totalorder %s171, %s174
      %p183 = scmp.eq.s32.totalorder %s27, 3
      %p184 = por %p182, %p183
      %p185 = scmp.ne.s32.totalorder %s174, %s175
      %p186 = scmp.eq.s32.totalorder %s27, 0
      %p187 = por %p185, %p186
      %p188 = scmp.ne.s32.totalorder %s174, %s175
      %p189 = scmp.eq.s32.totalorder %s28, 3
      %p190 = por %p188, %p189
      %p192 = scmp.ne.s32.totalorder %s175, %s191
      %p193 = scmp.eq.s32.totalorder %s28, 0
      %p194 = por %p192, %p193
      %p195 = scmp.le.s32.totalorder 1, %s22
      %p196 = scmp.lt.s32.totalorder %s22, 5
      %p197 = pnand %p195, %p196
      %p198 = pneg %p197
      // Predicated region
      $region9: #{tpu_custom_call.1} parent=5 // pred_check
        _
      $region10: #{tpu_custom_call.1} parent=5 // pred_check_branch
        %200 = sbr.rel (%p197) target = $region12
      $region11: #{tpu_custom_call.1} parent=5 // pred_region
        %s201 = ssub.s32 %s22, 1
        // Predicated region
        $region13: #{tpu_custom_call.1} parent=11 // pred_check
          %p202 = pneg %p119
        $region14: #{tpu_custom_call.1} parent=11 // pred_check_branch
          %204 = sbr.rel (%p202) target = $region16
        $region15: #{tpu_custom_call.1} parent=11 // pred_region
          _
        $region16: #{tpu_custom_call.1} parent=11 // pred_fallthru
          _
        // Predicated region
        $region17: #{tpu_custom_call.1} parent=11 // pred_check
          %p205 = pneg %p140
        $region18: #{tpu_custom_call.1} parent=11 // pred_check_branch
          %207 = sbr.rel (%p205) target = $region20
        $region19: #{tpu_custom_call.1} parent=11 // pred_region
          _
        $region20: #{tpu_custom_call.1} parent=11 // pred_fallthru
          _
        // Predicated region
        $region21: #{tpu_custom_call.1} parent=11 // pred_check
          %p208 = pneg %p161
        $region22: #{tpu_custom_call.1} parent=11 // pred_check_branch
          %210 = sbr.rel (%p208) target = $region24
        $region23: #{tpu_custom_call.1} parent=11 // pred_region
          _
        $region24: #{tpu_custom_call.1} parent=11 // pred_fallthru
          _
      $region12: #{tpu_custom_call.1} parent=5 // pred_fallthru
        _
      %p211 = scmp.lt.s32.totalorder %s22, 4
      // Predicated region
      $region25: #{tpu_custom_call.1} parent=5 // pred_check
        %p212 = pneg %p211
      $region26: #{tpu_custom_call.1} parent=5 // pred_check_branch
        %214 = sbr.rel (%p212) target = $region28
      $region27: #{tpu_custom_call.1} parent=5 // pred_region
        // Predicated region
        $region29: #{tpu_custom_call.1} parent=27 // pred_check
          %p215 = pneg %p66
        $region30: #{tpu_custom_call.1} parent=27 // pred_check_branch
          %217 = sbr.rel (%p215) target = $region32
        $region31: #{tpu_custom_call.1} parent=27 // pred_region
          %p218 = scmp.lt.s32.totalorder %s22, 0
          %s219 = ssub.s32 0, %s22
          %s220 = scalar_select %p218, %s219, %s22
          %s221 = sand.u32 %s220, 1
          %s222 = ssub.s32 0, %s221
          %s223 = scalar_select %p218, %s222, %s221
          %p224 = scmp.ne.s32.totalorder %s223, 0
          %p225 = scmp.lt.s32.totalorder %s223, 0
          %p226 = pnand %p225, %p224
          %p227 = pneg %p226
          %s228 = sadd.s32 %s223, 2
          %s229 = scalar_select %p227, %s228, %s223
          %p230 = scmp.lt.s32.totalorder %s229, 1
          %s231 = scalar_select %p230, %s229, 1
          %s232 = smul.addr %s231, 8
          %s233 = scalar_lea.vmem %s2, %s232
          %p234 = scmp.lt.s32.totalorder %s22, 0
          %s235 = ssub.s32 0, %s22
          %s236 = scalar_select %p234, %s235, %s22
          %s237 = sand.u32 %s236, 1
          %s238 = ssub.s32 0, %s237
          %s239 = scalar_select %p234, %s238, %s237
          %p240 = scmp.ne.s32.totalorder %s239, 0
          %p241 = scmp.lt.s32.totalorder %s239, 0
          %p242 = pnand %p241, %p240
          %p243 = pneg %p242
          %s244 = sadd.s32 %s239, 2
          %s245 = scalar_select %p243, %s244, %s239
        $region32: #{tpu_custom_call.1} parent=27 // pred_fallthru
          _
        // Predicated region
        $region33: #{tpu_custom_call.1} parent=27 // pred_check
          %p246 = pneg %p92
        $region34: #{tpu_custom_call.1} parent=27 // pred_check_branch
          %248 = sbr.rel (%p246) target = $region36
        $region35: #{tpu_custom_call.1} parent=27 // pred_region
          %p249 = scmp.lt.s32.totalorder %s22, 3
          %s250 = scalar_select %p249, %s22, 3
          %s251 = smul.addr %s250, 8
          %s252 = scalar_lea.vmem %s3, %s251
        $region36: #{tpu_custom_call.1} parent=27 // pred_fallthru
          _
      $region28: #{tpu_custom_call.1} parent=5 // pred_fallthru
        _
      %p253 = scmp.le.s32.totalorder 1, %s22
      %p254 = scmp.lt.s32.totalorder %s22, 5
      %p255 = pnand %p253, %p254
      %p256 = pneg %p255
      // Predicated region
      $region37: #{tpu_custom_call.1} parent=5 // pred_check
        _
      $region38: #{tpu_custom_call.1} parent=5 // pred_check_branch
        %258 = sbr.rel (%p255) target = $region40
      $region39: #{tpu_custom_call.1} parent=5 // pred_region
        %s259 = ssub.s32 %s22, 1
        %p260 = scmp.lt.s32.totalorder %s27, 0
        %s261 = ssub.s32 0, %s27
        %s262 = scalar_select %p260, %s261, %s27
        %s263 = sand.u32 %s262, 1
        %s264 = ssub.s32 0, %s263
        %s265 = scalar_select %p260, %s264, %s263
        %p266 = scmp.ne.s32.totalorder %s265, 0
        %p267 = scmp.lt.s32.totalorder %s265, 0
        %p268 = pnand %p267, %p266
        %p269 = pneg %p268
        %s270 = sadd.s32 %s265, 2
        %s271 = scalar_select %p269, %s270, %s265
        %p272 = scmp.lt.s32.totalorder %s271, 1
        %s273 = scalar_select %p272, %s271, 1
        %s274 = smul.addr %s273, 8
        %s275 = scalar_lea.vmem %s2, %s274
        %p276 = pneg %p72
        %p277 = pneg %p69
        %p278 = scmp.lt.s32.totalorder %s27, 3
        %s279 = scalar_select %p278, %s27, 3
        %s280 = smul.addr %s279, 8
        %s281 = scalar_lea.vmem %s3, %s280
        %p282 = pneg %p98
        %p283 = pneg %p95
        %p284 = pneg %p119
        %p285 = pneg %p116
        %p286 = pneg %p140
        %p287 = pneg %p137
        %p288 = pneg %p161
        %p289 = pneg %p158
        %p290 = pneg %p187
        %p291 = pneg %p184
        %s292 = sand.u32 %s174, 1
        %s293 = scalar_lea.sflag [#allocation7], %s292
        %s294 = sand.u32 %s174, 1
        %s295 = smul.addr %s294, 8
        %s296 = scalar_lea.vmem [#allocation6], %s295
        %p297 = scmp.lt.s32.totalorder %s27, 0
        %s298 = ssub.s32 0, %s27
        %s299 = scalar_select %p297, %s298, %s27
        %s300 = sand.u32 %s299, 1
        %s301 = ssub.s32 0, %s300
        %s302 = scalar_select %p297, %s301, %s300
        %p303 = scmp.ne.s32.totalorder %s302, 0
        %p304 = scmp.lt.s32.totalorder %s302, 0
        %p305 = pnand %p304, %p303
        %p306 = pneg %p305
        %s307 = sadd.s32 %s302, 2
        %s308 = scalar_select %p306, %s307, %s302
        %p309 = scmp.lt.s32.totalorder %s308, 1
        %s310 = scalar_select %p309, %s308, 1
        %s311 = smul.addr %s310, 8
        %s312 = scalar_lea.vmem %s2, %s311
        %p313 = scmp.lt.s32.totalorder %s27, 0
        %s314 = ssub.s32 0, %s27
        %s315 = scalar_select %p313, %s314, %s27
        %s316 = sand.u32 %s315, 1
        %s317 = ssub.s32 0, %s316
        %s318 = scalar_select %p313, %s317, %s316
        %p319 = scmp.ne.s32.totalorder %s318, 0
        %p320 = scmp.lt.s32.totalorder %s318, 0
        %p321 = pnand %p320, %p319
        %p322 = pneg %p321
        %s323 = sadd.s32 %s318, 2
        %s324 = scalar_select %p322, %s323, %s318
        %p325 = scmp.lt.s32.totalorder %s27, 3
        %s326 = scalar_select %p325, %s27, 3
        %s327 = smul.addr %s326, 8
        %s328 = scalar_lea.vmem %s3, %s327
        %s329 = smul.u32 %s27, 8
        %s330 = sadd.s32 %s329, 0
        %s331 = sld [smem:[#allocation5 + %s330]]
        %s332 = smul.addr %s331, 16
        %s333 = scalar_lea.hbm %s1, %s332
        // Predicated region
        $region41: #{tpu_custom_call.1} parent=39 // pred_check
          _
        $region42: #{tpu_custom_call.1} parent=39 // pred_check_branch
          %335 = sbr.rel target = $region44
        $region43: #{tpu_custom_call.1} parent=39 // pred_region
          %336 = sst [smem:[#allocation10]] [#allocation9]
          %337 = sst [smem:[#allocation11]] [#allocation8]
        $region44: #{tpu_custom_call.1} parent=39 // pred_fallthru
          _
        %339 = shalt.err (0)
        %s341 = sshll.u32 [#allocation2], 4
        %s342 = int_to_ptr.vmem [resolvable:$true] %s341
        %344 = dma.hbm_to_vmem [thread:$0]  %s333, 16, %s342, [#allocation3]
        %s345 = sadd.s32 0, 1
        %s346 = sadd.s32 %s329, %s345
        %s347 = sld [smem:[#allocation5 + %s346]]
        %s348 = smul.addr %s347, 16
        %s349 = scalar_lea.hbm %s1, %s348
        %s350 = scalar_lea.vmem [#allocation2], %s345
        // Predicated region
        $region45: #{tpu_custom_call.1} parent=39 // pred_check
          _
        $region46: #{tpu_custom_call.1} parent=39 // pred_check_branch
          %352 = sbr.rel target = $region48
        $region47: #{tpu_custom_call.1} parent=39 // pred_region
          %353 = sst [smem:[#allocation10]] [#allocation13]
          %354 = sst [smem:[#allocation11]] [#allocation12]
        $region48: #{tpu_custom_call.1} parent=39 // pred_fallthru
          _
        %356 = shalt.err (0)
        %s358 = sshll.u32 %s350, 4
        %s359 = int_to_ptr.vmem [resolvable:$true] %s358
        %361 = dma.hbm_to_vmem [thread:$0]  %s349, 16, %s359, [#allocation3]
        %s362 = sadd.s32 0, 2
        %s363 = sadd.s32 %s329, %s362
        %s364 = sld [smem:[#allocation5 + %s363]]
        %s365 = smul.addr %s364, 16
        %s366 = scalar_lea.hbm %s1, %s365
        %s367 = scalar_lea.vmem [#allocation2], %s362
        // Predicated region
        $region49: #{tpu_custom_call.1} parent=39 // pred_check
          _
        $region50: #{tpu_custom_call.1} parent=39 // pred_check_branch
          %369 = sbr.rel target = $region52
        $region51: #{tpu_custom_call.1} parent=39 // pred_region
          %370 = sst [smem:[#allocation10]] [#allocation15]
          %371 = sst [smem:[#allocation11]] [#allocation14]
        $region52: #{tpu_custom_call.1} parent=39 // pred_fallthru
          _
        %373 = shalt.err (0)
        %s375 = sshll.u32 %s367, 4
        %s376 = int_to_ptr.vmem [resolvable:$true] %s375
        %378 = dma.hbm_to_vmem [thread:$0]  %s366, 16, %s376, [#allocation3]
        %s379 = sadd.s32 0, 3
        %s380 = sadd.s32 %s329, %s379
        %s381 = sld [smem:[#allocation5 + %s380]]
        %s382 = smul.addr %s381, 16
        %s383 = scalar_lea.hbm %s1, %s382
        %s384 = scalar_lea.vmem [#allocation2], %s379
        // Predicated region
        $region53: #{tpu_custom_call.1} parent=39 // pred_check
          _
        $region54: #{tpu_custom_call.1} parent=39 // pred_check_branch
          %386 = sbr.rel target = $region56
        $region55: #{tpu_custom_call.1} parent=39 // pred_region
          %387 = sst [smem:[#allocation10]] [#allocation17]
          %388 = sst [smem:[#allocation11]] [#allocation16]
        $region56: #{tpu_custom_call.1} parent=39 // pred_fallthru
          _
        %390 = shalt.err (0)
        %s392 = sshll.u32 %s384, 4
        %s393 = int_to_ptr.vmem [resolvable:$true] %s392
        %395 = dma.hbm_to_vmem [thread:$0]  %s383, 16, %s393, [#allocation3]
        %s396 = sadd.s32 0, 4
        %s397 = sadd.s32 %s329, %s396
        %s398 = sld [smem:[#allocation5 + %s397]]
        %s399 = smul.addr %s398, 16
        %s400 = scalar_lea.hbm %s1, %s399
        %s401 = scalar_lea.vmem [#allocation2], %s396
        // Predicated region
        $region57: #{tpu_custom_call.1} parent=39 // pred_check
          _
        $region58: #{tpu_custom_call.1} parent=39 // pred_check_branch
          %403 = sbr.rel target = $region60
        $region59: #{tpu_custom_call.1} parent=39 // pred_region
          %404 = sst [smem:[#allocation10]] [#allocation19]
          %405 = sst [smem:[#allocation11]] [#allocation18]
        $region60: #{tpu_custom_call.1} parent=39 // pred_fallthru
          _
        %407 = shalt.err (0)
        %s409 = sshll.u32 %s401, 4
        %s410 = int_to_ptr.vmem [resolvable:$true] %s409
        %412 = dma.hbm_to_vmem [thread:$0]  %s400, 16, %s410, [#allocation3]
        %s413 = sadd.s32 0, 5
        %s414 = sadd.s32 %s329, %s413
        %s415 = sld [smem:[#allocation5 + %s414]]
        %s416 = smul.addr %s415, 16
        %s417 = scalar_lea.hbm %s1, %s416
        %s418 = scalar_lea.vmem [#allocation2], %s413
        // Predicated region
        $region61: #{tpu_custom_call.1} parent=39 // pred_check
          _
        $region62: #{tpu_custom_call.1} parent=39 // pred_check_branch
          %420 = sbr.rel target = $region64
        $region63: #{tpu_custom_call.1} parent=39 // pred_region
          %421 = sst [smem:[#allocation10]] [#allocation21]
          %422 = sst [smem:[#allocation11]] [#allocation20]
        $region64: #{tpu_custom_call.1} parent=39 // pred_fallthru
          _
        %424 = shalt.err (0)
        %s426 = sshll.u32 %s418, 4
        %s427 = int_to_ptr.vmem [resolvable:$true] %s426
        %429 = dma.hbm_to_vmem [thread:$0]  %s417, 16, %s427, [#allocation3]
        %s430 = sadd.s32 0, 6
        %s431 = sadd.s32 %s329, %s430
        %s432 = sld [smem:[#allocation5 + %s431]]
        %s433 = smul.addr %s432, 16
        %s434 = scalar_lea.hbm %s1, %s433
        %s435 = scalar_lea.vmem [#allocation2], %s430
        // Predicated region
        $region65: #{tpu_custom_call.1} parent=39 // pred_check
          _
        $region66: #{tpu_custom_call.1} parent=39 // pred_check_branch
          %437 = sbr.rel target = $region68
        $region67: #{tpu_custom_call.1} parent=39 // pred_region
          %438 = sst [smem:[#allocation10]] [#allocation23]
          %439 = sst [smem:[#allocation11]] [#allocation22]
        $region68: #{tpu_custom_call.1} parent=39 // pred_fallthru
          _
        %441 = shalt.err (0)
        %s443 = sshll.u32 %s435, 4
        %s444 = int_to_ptr.vmem [resolvable:$true] %s443
        %446 = dma.hbm_to_vmem [thread:$0]  %s434, 16, %s444, [#allocation3]
        %s447 = sadd.s32 0, 7
        %s448 = sadd.s32 %s329, %s447
        %s449 = sld [smem:[#allocation5 + %s448]]
        %s450 = smul.addr %s449, 16
        %s451 = scalar_lea.hbm %s1, %s450
        %s452 = scalar_lea.vmem [#allocation2], %s447
        // Predicated region
        $region69: #{tpu_custom_call.1} parent=39 // pred_check
          _
        $region70: #{tpu_custom_call.1} parent=39 // pred_check_branch
          %454 = sbr.rel target = $region72
        $region71: #{tpu_custom_call.1} parent=39 // pred_region
          %455 = sst [smem:[#allocation10]] [#allocation25]
          %456 = sst [smem:[#allocation11]] [#allocation24]
        $region72: #{tpu_custom_call.1} parent=39 // pred_fallthru
          _
        %458 = shalt.err (0)
        %s460 = sshll.u32 %s452, 4
        %s461 = int_to_ptr.vmem [resolvable:$true] %s460
        %463 = dma.hbm_to_vmem [thread:$0]  %s451, 16, %s461, [#allocation3]
        %v464 = vld [vmem:[%s328] sm:$0xff]
        %vm465 = vcmp.eq.s32.totalorder %v464, 0
        %v466 = vsel %vm465, 1, 0
        %v467 = vcvt.s32.f32 %v466
        %v468 = vld [vmem:[%s4] sm:$0x1]
        %470 = vset.pattern.permute.xlu0 0
        %471 = vperm.xlu0 %470, %v467
        %v472 = vpop.permute.xlu0 %471
        %v474 = vlaneseq
        %v475 = vshrl.u32 %v474, 7
        %v476 = vsub.s32 0, %v475
        %v477 = vrot.slane %v468, %v476
        %v478 = vmul.f32 %v472, %v477
        %vm479 = vcmp.eq.s32.totalorder %v464, 1
        %v480 = vsel %vm479, 1, 0
        %v481 = vcvt.s32.f32 %v480
        %v482 = vld [vmem:[%s4 + $0x1] sm:$0x1]
        %484 = vset.pattern.permute.xlu0 0
        %485 = vperm.xlu0 %484, %v481
        %v486 = vpop.permute.xlu0 %485
        %v488 = vlaneseq
        %v489 = vshrl.u32 %v488, 7
        %v490 = vsub.s32 0, %v489
        %v491 = vrot.slane %v482, %v490
        %v492 = vmul.f32 %v486, %v491
        %v493 = vadd.f32 %v478, %v492
        %v494 = vld [vmem:[%s312] sm:$0xff]
        %v495 = vld [vmem:[%s5] sm:$0x1]
        %v496 = vld [vmem:[%s6] sm:$0x1]
        %s497 = smul.u32 8, 1
        %s498 = sshll.u32 %s497, 4
        %499 = dma.done [#allocation3], %s498
        %v500 = vld [vmem:[#allocation2] sm:$0xff]
        %v501 = vadd.f32 %v500, %v493
        %v502 = vadd.f32 %v501, %v494
        %503 = vadd.xlane.f32.xlu0 %v502
        %v504 = vpop.xlane.xlu0 %503
        %v505 = vrcp.pop 128.0
        %v506 = vmul.f32 %v504, %v505
        %v507 = vsub.f32 %v502, %v506
        %v508 = vmul.f32 %v507, %v507
        %509 = vadd.xlane.f32.xlu0 %v508
        %v510 = vpop.xlane.xlu0 %509
        %v511 = vmul.f32 %v510, %v505
        %v512 = vadd.f32 %v511, 1e-12
        %v513 = vrsqrt.pop %v512
        %v514 = vmul.f32 %v507, %v513
        %v516 = vlaneseq
        %v517 = vshrl.u32 %v516, 7
        %v518 = vsub.s32 0, %v517
        %v519 = vrot.slane %v495, %v518
        %v521 = vmul.f32 %v514, %v519
        %v523 = vlaneseq
        %v524 = vshrl.u32 %v523, 7
        %v525 = vsub.s32 0, %v524
        %v526 = vrot.slane %v496, %v525
        %v528 = vadd.f32 %v521, %v526
        %529 = vst [vmem:[%s296] sm:$0xff] %v528
        %s530 = sand.u32 %s174, 1
        %s531 = scalar_lea.sflag [#allocation7], %s530
        %s532 = sand.u32 %s174, 1
        %s533 = smul.addr %s532, 8
        %s534 = scalar_lea.vmem [#allocation6], %s533
        // Predicated region
        $region73: #{tpu_custom_call.1} parent=39 // pred_check
          %p535 = pneg %p184
        $region74: #{tpu_custom_call.1} parent=39 // pred_check_branch
          %537 = sbr.rel (%p535) target = $region76
        $region75: #{tpu_custom_call.1} parent=39 // pred_region
          %s539 = ssub.s32 128, 128
          %540 = vsyncadd %s531, %s539
          %s541 = smul.addr %s27, 128
          %s542 = scalar_lea.hbm %s7, %s541
          %s544 = sshll.u32 %s534, 4
          %s545 = int_to_ptr.vmem [resolvable:$true] %s544
          %547 = dma.vmem_to_hbm [thread:$0]  %s545, 128, %s542, %s531
        $region76: #{tpu_custom_call.1} parent=39 // pred_fallthru
          _
      $region40: #{tpu_custom_call.1} parent=5 // pred_fallthru
        _
      %p548 = scmp.le.s32.totalorder 2, %s22
      // Predicated region
      $region77: #{tpu_custom_call.1} parent=5 // pred_check
        %p549 = pneg %p548
      $region78: #{tpu_custom_call.1} parent=5 // pred_check_branch
        %551 = sbr.rel (%p549) target = $region80
      $region79: #{tpu_custom_call.1} parent=5 // pred_region
        %s552 = ssub.s32 %s22, 2
        // Predicated region
        $region81: #{tpu_custom_call.1} parent=79 // pred_check
          %p553 = pneg %p190
        $region82: #{tpu_custom_call.1} parent=79 // pred_check_branch
          %555 = sbr.rel (%p553) target = $region84
        $region83: #{tpu_custom_call.1} parent=79 // pred_region
          %s556 = sand.u32 %s175, 1
          %s557 = scalar_lea.sflag [#allocation7], %s556
          %s558 = sand.u32 %s175, 1
          %s559 = smul.addr %s558, 8
          %s560 = scalar_lea.vmem [#allocation6], %s559
          %561 = dma.done %s557, 128
        $region84: #{tpu_custom_call.1} parent=79 // pred_fallthru
          _
      $region80: #{tpu_custom_call.1} parent=5 // pred_fallthru
        _
    $region6: #{tpu_custom_call.1} parent=1 // loop_footer
      %s26 = sadd.s32 1, %s22
    $region7: #{tpu_custom_call.1} parent=1 // loop_footer_branch
      %21 = sbr.rel target = $region3
    $region8: #{tpu_custom_call.1} parent=1 // loop_exit
      _
    %562 = vsyncpa [#allocation7], 1
    %s563 = scalar_lea.sflag [#allocation7], 1
    %564 = vsyncpa %s563, 1
  %565 = vsyncmov [#allocation3]
  %s566 = vpop.sfrf %565
  %p567 = scmp.eq.s32.totalorder %s566, 0
  %p568 = pneg %p567
  %570 = shalt.err (%p568)

</llo_original>
